<compile_context>
chip_gen: v7x
topology: tpu7x:2x2x1
jax: 0.10.0
libtpu: 0.0.40
codegen_flags: <defaults>
</compile_context>

<pallas_src>
import functools

import jax
import jax.numpy as jnp
from jax.experimental import pallas as pl
from jax.experimental.pallas import tpu as pltpu


def convblock_kernel(col_ref, w_ref, params_ref, o_ref, *, linear, n_batch, hw):
    """Fused im2col-matmul + BatchNorm(inference) + PReLU epilogue.

    col_ref:    (K, N*HW)     im2col'd input, bf16, lane-dense (N*HW multiple of 128)
    w_ref:      (Cout, K)     conv weights as one matrix, bf16
    params_ref: (3, Cout, 1)  f32 rows = [bn_scale, bn_bias, prelu_alpha]
    o_ref:      (N, Cout, HW) lane-dense NCHW-style output slab
    """
    # Single MXU push: (Cout, K) @ (K, N*HW) -> (Cout, N*HW), f32 accumulation.
    acc = jax.lax.dot_general(
        w_ref[...], col_ref[...],
        dimension_numbers=(((1,), (0,)), ((), ())),
        preferred_element_type=jnp.float32)

    # BatchNorm (inference): scale applied in the f32 epilogue (numerically safer than
    # folding it into the bf16 weights).  (Cout, 1) broadcasts over the lane axis.
    scale = params_ref[0]
    bias = params_ref[1]
    y = acc * scale + bias

    if not linear:                                   # PReLU, per output channel
        alpha = params_ref[2]
        y = jnp.where(y > 0, y, y * alpha)

    y = y.astype(o_ref.dtype)
    # Columns are n-major; HW is a multiple of 128, so these are 128-aligned full-width
    # lane slices -> dense vst stores, no masking, no relayout.
    for n in range(n_batch):
        o_ref[n] = y[:, n * hw:(n + 1) * hw]


def conv_block(x_nchw, w_oihw, gamma, beta, run_mean, run_var, alpha,
               *, stride=1, padding=1, eps=1e-5, linear=False,
               compute_dtype=jnp.bfloat16):
    """Forward of ConvBlock (eval-mode BN).  x_nchw: [N, Cin, H, W] (PyTorch layout)."""
    N, Cin, H, W = x_nchw.shape
    Cout, Cin_w, KH, KW = w_oihw.shape
    assert Cin_w == Cin, "depthwise/grouped conv not implemented"

    Hp, Wp = H + 2 * padding, W + 2 * padding
    Hout = (Hp - KH) // stride + 1
    Wout = (Wp - KW) // stride + 1
    HW = Hout * Wout
    K = KH * KW * Cin
    assert HW % 128 == 0, "demo assumes Hout*Wout is a multiple of 128 for dense stores"

    # ---- wrapper glue (XLA): zero-pad + im2col + bf16 cast ----
    x_pad = jnp.pad(x_nchw, ((0, 0), (0, 0), (padding, padding), (padding, padding)))
    taps = []
    for kh in range(KH):
        for kw in range(KW):
            taps.append(x_pad[:, :, kh:kh + stride * Hout:stride,
                              kw:kw + stride * Wout:stride])      # (N, Cin, Hout, Wout)
    col = jnp.stack(taps, axis=1)                   # (N, KH*KW, Cin, Hout, Wout)
    col = col.reshape(N, K, HW)                     # K row order = (kh, kw, cin)
    col = jnp.transpose(col, (1, 0, 2)).reshape(K, N * HW)   # columns n-major
    col = col.astype(compute_dtype)

    # (Cout, Cin, KH, KW) -> (Cout, K) with the matching (kh, kw, cin) row order.
    w_mat = jnp.transpose(w_oihw, (0, 2, 3, 1)).reshape(Cout, K).astype(compute_dtype)

    # BN (inference) scale/bias + PReLU slope, merged into a single f32 operand.
    scale = gamma / jnp.sqrt(run_var + eps)                       # (Cout,)
    bias = beta - run_mean * scale                                # (Cout,)
    params = jnp.stack([scale, bias, alpha]).reshape(3, Cout, 1).astype(jnp.float32)

    kernel = functools.partial(convblock_kernel, linear=linear, n_batch=N, hw=HW)

    out_flat = pl.pallas_call(
        kernel,
        out_shape=jax.ShapeDtypeStruct((N, Cout, HW), x_nchw.dtype),
        grid_spec=pltpu.PrefetchScalarGridSpec(
            num_scalar_prefetch=0,
            grid=(1,),
            in_specs=[
                pl.BlockSpec((K, N * HW), lambda i: (0, 0)),
                pl.BlockSpec((Cout, K), lambda i: (0, 0)),
                pl.BlockSpec((3, Cout, 1), lambda i: (0, 0, 0)),
            ],
            out_specs=pl.BlockSpec((N, Cout, HW), lambda i: (0, 0, 0)),
        ),
        compiler_params=pltpu.CompilerParams(
            dimension_semantics=("arbitrary",)),
    )(col, w_mat, params)

    # Row-major reshape back to NCHW -- no output transpose needed.
    return out_flat.reshape(N, Cout, Hout, Wout)


def reference(x_nchw, w_oihw, gamma, beta, run_mean, run_var, alpha,
              *, stride=1, padding=1, eps=1e-5, linear=False):
    """Pure-JAX f32 reference matching PyTorch semantics (eval-mode BN)."""
    y = jax.lax.conv_general_dilated(
        x_nchw, w_oihw, window_strides=(stride, stride),
        padding=[(padding, padding), (padding, padding)],
        dimension_numbers=("NCHW", "OIHW", "NCHW"),
        precision=jax.lax.Precision.HIGHEST)
    scale = (gamma / jnp.sqrt(run_var + eps)).reshape(1, -1, 1, 1)
    bias = (beta - run_mean * gamma / jnp.sqrt(run_var + eps)).reshape(1, -1, 1, 1)
    y = y * scale + bias
    if not linear:
        y = jnp.where(y > 0, y, y * alpha.reshape(1, -1, 1, 1))
    return y


if __name__ == "__main__":
    # ConvBlock(inp=4, oup=8, k=3, s=1, p=1, dw=False, linear=False)
    N, Cin, H, W = 2, 4, 16, 16
    Cout, K, S, P = 8, 3, 1, 1

    key = jax.random.PRNGKey(0)
    kx, kw, kg, kb, km, kv = jax.random.split(key, 6)

    x = jax.random.normal(kx, (N, Cin, H, W), dtype=jnp.float32)
    w = jax.random.normal(kw, (Cout, Cin, K, K), dtype=jnp.float32) * 0.1
    gamma = 1.0 + 0.1 * jax.random.normal(kg, (Cout,), dtype=jnp.float32)
    beta = 0.1 * jax.random.normal(kb, (Cout,), dtype=jnp.float32)
    run_mean = 0.1 * jax.random.normal(km, (Cout,), dtype=jnp.float32)
    run_var = jnp.abs(1.0 + 0.1 * jax.random.normal(kv, (Cout,), dtype=jnp.float32))
    alpha = jnp.full((Cout,), 0.25, dtype=jnp.float32)   # PReLU default init

    out = conv_block(x, w, gamma, beta, run_mean, run_var, alpha,
                     stride=S, padding=P, linear=False)
    out = jax.block_until_ready(out)

    ref = reference(x, w, gamma, beta, run_mean, run_var, alpha,
                    stride=S, padding=P, linear=False)
    assert out.shape == (N, Cout, H, W)
    # bf16 conv operands with f32 accumulation and f32 BN/PReLU epilogue.
    assert jnp.allclose(out, ref, atol=5e-2, rtol=5e-2), "mismatch vs reference"

    print("KERNEL_OK")
</pallas_src>

<mosaic_0001>
module attributes {stable_mosaic.version = 11 : i64} {
  func.func @convblock_kernel(%arg0: i32, %arg1: memref<36x512xbf16, #tpu.memory_space<vmem>>, %arg2: memref<8x36xbf16, #tpu.memory_space<vmem>>, %arg3: memref<3x8x1xf32, #tpu.memory_space<vmem>>, %arg4: memref<2x8x256xf32, #tpu.memory_space<vmem>>) attributes {dimension_semantics = [#tpu.dimension_semantics<arbitrary>], iteration_bounds = array<i64: 1>, scalar_prefetch = 0 : i64, scratch_operands = 0 : i64, tpu.core_type = #tpu.core_type<tc>, window_params = [{pipeline_mode = #tpu.pipeline_mode<synchronous>, transform_indices = @transform_0, window_bounds = array<i64: 36, 512>}, {pipeline_mode = #tpu.pipeline_mode<synchronous>, transform_indices = @transform_1, window_bounds = array<i64: 8, 36>}, {pipeline_mode = #tpu.pipeline_mode<synchronous>, transform_indices = @transform_2, window_bounds = array<i64: 3, 8, 1>}, {pipeline_mode = #tpu.pipeline_mode<synchronous>, transform_indices = @transform_3, window_bounds = array<i64: 2, 8, 256>}]} {
    %c0 = arith.constant 0 : index
    %c0_0 = arith.constant 0 : index
    %0 = vector.load %arg2[%c0, %c0_0] : memref<8x36xbf16, #tpu.memory_space<vmem>>, vector<8x36xbf16>
    %c0_1 = arith.constant 0 : index
    %c0_2 = arith.constant 0 : index
    %1 = vector.load %arg1[%c0_1, %c0_2] : memref<36x512xbf16, #tpu.memory_space<vmem>>, vector<36x512xbf16>
    %cst = arith.constant dense<0.000000e+00> : vector<8x512xf32>
    %2 = tpu.matmul %0, %1, %cst {dimension_numbers = #tpu.dot_dimension_numbers<[1], [0], [0], [1], [0, 0, 1, 1], [], []>} : vector<8x36xbf16>, vector<36x512xbf16>, vector<8x512xf32> -> vector<8x512xf32>
    %c0_3 = arith.constant 0 : index
    %c0_4 = arith.constant 0 : index
    %c0_5 = arith.constant 0 : index
    %3 = vector.load %arg3[%c0_3, %c0_4, %c0_5] : memref<3x8x1xf32, #tpu.memory_space<vmem>>, vector<1x8x1xf32>
    %4 = vector.shape_cast %3 : vector<1x8x1xf32> to vector<8x1xf32>
    %c1 = arith.constant 1 : index
    %c0_6 = arith.constant 0 : index
    %c0_7 = arith.constant 0 : index
    %5 = vector.load %arg3[%c1, %c0_6, %c0_7] : memref<3x8x1xf32, #tpu.memory_space<vmem>>, vector<1x8x1xf32>
    %6 = vector.shape_cast %5 : vector<1x8x1xf32> to vector<8x1xf32>
    %7 = vector.broadcast %4 : vector<8x1xf32> to vector<8x512xf32>
    %8 = arith.mulf %2, %7 : vector<8x512xf32>
    %9 = vector.broadcast %6 : vector<8x1xf32> to vector<8x512xf32>
    %10 = arith.addf %8, %9 : vector<8x512xf32>
    %c2 = arith.constant 2 : index
    %c0_8 = arith.constant 0 : index
    %c0_9 = arith.constant 0 : index
    %11 = vector.load %arg3[%c2, %c0_8, %c0_9] : memref<3x8x1xf32, #tpu.memory_space<vmem>>, vector<1x8x1xf32>
    %12 = vector.shape_cast %11 : vector<1x8x1xf32> to vector<8x1xf32>
    %cst_10 = arith.constant 0.000000e+00 : f32
    %13 = vector.broadcast %cst_10 : f32 to vector<8x512xf32>
    %14 = arith.cmpf ogt, %10, %13 : vector<8x512xf32>
    %15 = vector.broadcast %12 : vector<8x1xf32> to vector<8x512xf32>
    %16 = arith.mulf %10, %15 : vector<8x512xf32>
    %17 = arith.select %14, %10, %16 : vector<8x512xi1>, vector<8x512xf32>
    %18 = vector.extract_strided_slice %17 {offsets = [0, 0], sizes = [8, 256], strides = [1, 1]} : vector<8x512xf32> to vector<8x256xf32>
    %c0_11 = arith.constant 0 : index
    %c0_12 = arith.constant 0 : index
    %c0_13 = arith.constant 0 : index
    %19 = vector.load %arg4[%c0_11, %c0_12, %c0_13] : memref<2x8x256xf32, #tpu.memory_space<vmem>>, vector<1x8x256xf32>
    %20 = vector.shape_cast %19 : vector<1x8x256xf32> to vector<8x256xf32>
    %21 = vector.shape_cast %18 : vector<8x256xf32> to vector<1x8x256xf32>
    tpu.vector_store %arg4[%c0_11, %c0_12, %c0_13], %21 {strides = array<i32>} : memref<2x8x256xf32, #tpu.memory_space<vmem>>, vector<1x8x256xf32>,
    %22 = vector.extract_strided_slice %17 {offsets = [0, 256], sizes = [8, 256], strides = [1, 1]} : vector<8x512xf32> to vector<8x256xf32>
    %c1_14 = arith.constant 1 : index
    %c0_15 = arith.constant 0 : index
    %c0_16 = arith.constant 0 : index
    %23 = vector.load %arg4[%c1_14, %c0_15, %c0_16] : memref<2x8x256xf32, #tpu.memory_space<vmem>>, vector<1x8x256xf32>
    %24 = vector.shape_cast %23 : vector<1x8x256xf32> to vector<8x256xf32>
    %25 = vector.shape_cast %22 : vector<8x256xf32> to vector<1x8x256xf32>
    tpu.vector_store %arg4[%c1_14, %c0_15, %c0_16], %25 {strides = array<i32>} : memref<2x8x256xf32, #tpu.memory_space<vmem>>, vector<1x8x256xf32>,
    return
  }
  func.func @transform_0(%arg0: i32) -> (i32, i32) {
    %c0_i32 = arith.constant 0 : i32
    %c0_i32_0 = arith.constant 0 : i32
    %c0_i32_1 = arith.constant 0 : i32
    return %c0_i32, %c0_i32_0 : i32, i32
  }
  func.func @transform_1(%arg0: i32) -> (i32, i32) {
    %c0_i32 = arith.constant 0 : i32
    %c0_i32_0 = arith.constant 0 : i32
    %c0_i32_1 = arith.constant 0 : i32
    return %c0_i32, %c0_i32_0 : i32, i32
  }
  func.func @transform_2(%arg0: i32) -> (i32, i32, i32) {
    %c0_i32 = arith.constant 0 : i32
    %c0_i32_0 = arith.constant 0 : i32
    %c0_i32_1 = arith.constant 0 : i32
    %c0_i32_2 = arith.constant 0 : i32
    return %c0_i32, %c0_i32_0, %c0_i32_1 : i32, i32, i32
  }
  func.func @transform_3(%arg0: i32) -> (i32, i32, i32) {
    %c0_i32 = arith.constant 0 : i32
    %c0_i32_0 = arith.constant 0 : i32
    %c0_i32_1 = arith.constant 0 : i32
    %c0_i32_2 = arith.constant 0 : i32
    return %c0_i32, %c0_i32_0, %c0_i32_1 : i32, i32, i32
  }
}

</mosaic_0001>

<llo_original>
// kernel: tpu_custom_call.1
$region0: #{tpu_custom_call.1}
  #allocation0 [shape = 'u32[]', space=smem, size = 0x4, offset = 0x4, fixed_abs, tag = 'smem constant byte address 0x4 - core index']
  #allocation1 [shape = 'u32[144,128]{1,0:T(1,128)}', space=vmem, size = 0x12000, scoped, tag = 'internal scratch']
  %s0 = inlined_call_operand.hbm [shape: bf16[36,512], index: 0, kind: input, shape index: {}]
  %s1 = inlined_call_operand.vmem [shape: bf16[8,36], index: 1, kind: input, shape index: {}]
  %s2 = inlined_call_operand.vmem [shape: f32[3,8,1], index: 2, kind: input, shape index: {}]
  %s3 = inlined_call_operand.hbm [shape: f32[2,8,256], index: 3, kind: output, shape index: {}]
  %s4 = sld [smem:[#allocation0]]
  $region26: #{tpu_custom_call.1} parent=0
    _
  %s6 = ssub.s32 1, %s4
  %s7 = scalar_select 0, %s6, %s4
  $region1: #{tpu_custom_call.1} parent=0
    #allocation2 [shape = 'u8[40960]{0}', space=vmem, size = 0xa000, scoped, tag = 'input window, operand 0, single buffered']
    #allocation3 [shape = 's32[1]{0}', space=sflag, size = 0x4, scoped, tag = 'scoped memory for tpu_custom_call.1']
    #allocation4 [shape = 's32[1]{0}', space=sflag, size = 0x4, scoped, tag = 'scoped memory for tpu_custom_call.1']
    #allocation5 [shape = 'u8[16384]{0}', space=vmem, size = 0x4000, scoped, tag = 'output window, operand 0, single buffered']
    %8 = vsyncpa [#allocation3], 0
    %9 = vsyncpa [#allocation4], 0
    // Predicated region
    $region2: #{tpu_custom_call.1} parent=1 // pred_check
      _
    $region3: #{tpu_custom_call.1} parent=1 // pred_check_branch
      %11 = sbr.rel (0) target = $region5
    $region4: #{tpu_custom_call.1} parent=1 // pred_region
      %s13 = ssub.s32 1280, 1280
      %14 = vsyncadd [#allocation3], %s13
      %s15 = sshll.u32 [#allocation2], 4
      %s16 = int_to_ptr.vmem [resolvable:$true] %s15
      %21 = dma.hbm_to_vmem [thread:$0]  %s0, 1280, %s16, [#allocation3], 256, 256, 16
    $region5: #{tpu_custom_call.1} parent=1 // pred_fallthru
      _
    // Predicated region
    $region6: #{tpu_custom_call.1} parent=1 // pred_check
      _
    $region7: #{tpu_custom_call.1} parent=1 // pred_check_branch
      %23 = sbr.rel (0) target = $region9
    $region8: #{tpu_custom_call.1} parent=1 // pred_region
      _
    $region9: #{tpu_custom_call.1} parent=1 // pred_fallthru
      _
    // Predicated region
    $region10: #{tpu_custom_call.1} parent=1 // pred_check
      _
    $region11: #{tpu_custom_call.1} parent=1 // pred_check_branch
      %25 = sbr.rel (0) target = $region13
    $region12: #{tpu_custom_call.1} parent=1 // pred_region
      _
    $region13: #{tpu_custom_call.1} parent=1 // pred_fallthru
      _
    // Predicated region
    $region14: #{tpu_custom_call.1} parent=1 // pred_check
      _
    $region15: #{tpu_custom_call.1} parent=1 // pred_check_branch
      %27 = sbr.rel (0) target = $region17
    $region16: #{tpu_custom_call.1} parent=1 // pred_region
      %28 = dma.done [#allocation3], 1280
    $region17: #{tpu_custom_call.1} parent=1 // pred_fallthru
      _
    %v30 = vld [vmem:[%s1] sm:$0xf]
    %v31 = vld [vmem:[#allocation2] sm:$0xff]
    %v32 = vld [vmem:[#allocation2 + $0x8] sm:$0xff]
    %v33 = vld [vmem:[#allocation2 + $0x10] sm:$0xff]
    %v34 = vld [vmem:[#allocation2 + $0x18] sm:$0xff]
    %v35 = vld [vmem:[#allocation2 + $0x20] sm:$0xff]
    %v36 = vld [vmem:[#allocation2 + $0x28] sm:$0xff]
    %v37 = vld [vmem:[#allocation2 + $0x30] sm:$0xff]
    %v38 = vld [vmem:[#allocation2 + $0x38] sm:$0xff]
    %v39 = vld [vmem:[#allocation2 + $0x40] sm:$0x33]
    %v40 = vld [vmem:[#allocation2 + $0x48] sm:$0x33]
    %v51 = vunpack.c.l.b16 %v31
    %v52 = vunpack.c.h.b16 %v31
    %v53 = vunpack.c.l.b16 %v32
    %v54 = vunpack.c.h.b16 %v32
    %v55 = vunpack.c.l.b16 %v33
    %v56 = vunpack.c.h.b16 %v33
    %v57 = vunpack.c.l.b16 %v34
    %v58 = vunpack.c.h.b16 %v34
    %v59 = vunpack.c.l.b16 %v35
    %v60 = vunpack.c.h.b16 %v35
    %v61 = vunpack.c.l.b16 %v36
    %v62 = vunpack.c.h.b16 %v36
    %v63 = vunpack.c.l.b16 %v37
    %v64 = vunpack.c.h.b16 %v37
    %v65 = vunpack.c.l.b16 %v38
    %v66 = vunpack.c.h.b16 %v38
    %v67 = vunpack.c.l.b16 %v39
    %v68 = vunpack.c.h.b16 %v39
    %v69 = vunpack.c.l.b16 %v40
    %v70 = vunpack.c.h.b16 %v40
    %v71 = vpack.c.b16 %v55, %v51
    %v72 = vpack.c.b16 %v56, %v52
    %v73 = vpack.c.b16 %v57, %v53
    %v74 = vpack.c.b16 %v58, %v54
    %v75 = vpack.c.b16 %v63, %v59
    %v76 = vpack.c.b16 %v64, %v60
    %v77 = vpack.c.b16 %v65, %v61
    %v78 = vpack.c.b16 %v66, %v62
    %v79 = vpack.c.b16 %v67, %v67
    %v80 = vpack.c.b16 %v68, %v68
    %v81 = vpack.c.b16 %v69, %v69
    %v82 = vpack.c.b16 %v70, %v70
    %vm91 = vcmask 293888
    %v93 = vsel %vm91, %v30, 0
    %vm95 = vcmask 1041408
    %v97 = vsel %vm95, %v79, 0
    %v100 = vsel %vm95, %v80, 0
    %v103 = vsel %vm95, %v81, 0
    %v106 = vsel %vm95, %v82, 0
    %108 = vmatprep.subr.bf16.mxu0 %v72
    %109 = vmatpush1.bf16.msra.mxu0 %v71
    %110 = vmatprep.subr.bf16.mxu0 %v76
    %111 = vmatpush1.bf16.msra.mxu0 %v75
    %112 = vmatprep.subr.bf16.mxu0 %v100
    %113 = vmatpush1.bf16.msra.mxu0 %v97
    %114 = vmatprep.subr.bf16.mxu0 0
    %115 = vmatpush1.bf16.msra.mxu0 0
    %116 = vmatprep.subr.bf16.mxu0 0
    %117 = vmatpush1.bf16.msra.mxu0 0
    %118 = vmatprep.subr.bf16.mxu0 0
    %119 = vmatpush1.bf16.msra.mxu0 0
    %120 = vmatprep.subr.bf16.mxu0 0
    %121 = vmatpush1.bf16.msra.mxu0 0
    %122 = vmatprep.subr.bf16.mxu0 0
    %123 = vmatpush1.bf16.msra.mxu0 0
    %124 = vmatprep.subr.bf16.mxu0 0
    %125 = vmatpush1.bf16.msra.mxu0 0
    %126 = vmatprep.subr.bf16.mxu0 0
    %127 = vmatpush1.bf16.msra.mxu0 0
    %128 = vmatprep.subr.bf16.mxu0 0
    %129 = vmatpush1.bf16.msra.mxu0 0
    %130 = vmatprep.subr.bf16.mxu0 0
    %131 = vmatpush1.bf16.msra.mxu0 0
    %132 = vmatprep.subr.bf16.mxu0 0
    %133 = vmatpush1.bf16.msra.mxu0 0
    %134 = vmatprep.subr.bf16.mxu0 0
    %135 = vmatpush1.bf16.msra.mxu0 0
    %136 = vmatprep.subr.bf16.mxu0 0
    %137 = vmatpush1.bf16.msra.mxu0 0
    %138 = vmatprep.subr.bf16.mxu0 0
    %139 = vmatpush1.bf16.msra.mxu0 0
    %140 = vmatprep.mubr.bf16.mxu0 0
    %141 = vmatmul.mubr.bf16.gmra.mrb[0].mxu0 %v93
    %v142 = vpop.f32.mrb[0].mxu0
    %v143 = vadd.f32 0.0, %v142
    %v144 = vpop.f32.mrb[0].mxu0
    %v145 = vadd.f32 0.0, %v144
    %v146 = vpop.f32.mrb[0].mxu0
    %v147 = vpop.f32.mrb[0].mxu0
    %148 = vdwg.mxu0
    %149 = vmatprep.subr.bf16.mxu0 %v74
    %150 = vmatpush1.bf16.msra.mxu0 %v73
    %151 = vmatprep.subr.bf16.mxu0 %v78
    %152 = vmatpush1.bf16.msra.mxu0 %v77
    %153 = vmatprep.subr.bf16.mxu0 %v106
    %154 = vmatpush1.bf16.msra.mxu0 %v103
    %155 = vmatprep.subr.bf16.mxu0 0
    %156 = vmatpush1.bf16.msra.mxu0 0
    %157 = vmatprep.subr.bf16.mxu0 0
    %158 = vmatpush1.bf16.msra.mxu0 0
    %159 = vmatprep.subr.bf16.mxu0 0
    %160 = vmatpush1.bf16.msra.mxu0 0
    %161 = vmatprep.subr.bf16.mxu0 0
    %162 = vmatpush1.bf16.msra.mxu0 0
    %163 = vmatprep.subr.bf16.mxu0 0
    %164 = vmatpush1.bf16.msra.mxu0 0
    %165 = vmatprep.subr.bf16.mxu0 0
    %166 = vmatpush1.bf16.msra.mxu0 0
    %167 = vmatprep.subr.bf16.mxu0 0
    %168 = vmatpush1.bf16.msra.mxu0 0
    %169 = vmatprep.subr.bf16.mxu0 0
    %170 = vmatpush1.bf16.msra.mxu0 0
    %171 = vmatprep.subr.bf16.mxu0 0
    %172 = vmatpush1.bf16.msra.mxu0 0
    %173 = vmatprep.subr.bf16.mxu0 0
    %174 = vmatpush1.bf16.msra.mxu0 0
    %175 = vmatprep.subr.bf16.mxu0 0
    %176 = vmatpush1.bf16.msra.mxu0 0
    %177 = vmatprep.subr.bf16.mxu0 0
    %178 = vmatpush1.bf16.msra.mxu0 0
    %179 = vmatprep.subr.bf16.mxu0 0
    %180 = vmatpush1.bf16.msra.mxu0 0
    %181 = vmatprep.mubr.bf16.mxu0 0
    %182 = vmatmul.mubr.bf16.gmra.mrb[0].mxu0 %v93
    %v183 = vpop.f32.mrb[0].mxu0
    %v184 = vadd.f32 0.0, %v183
    %v185 = vpop.f32.mrb[0].mxu0
    %v186 = vadd.f32 0.0, %v185
    %v187 = vpop.f32.mrb[0].mxu0
    %v188 = vpop.f32.mrb[0].mxu0
    %189 = vdwg.mxu0
    %v190 = vld [vmem:[%s2] sm:$0xff]
    %s191 = scalar_lea.vmem %s2, 8
    %v192 = vld [vmem:[%s191] sm:$0xff]
    %194 = vset.pattern.permute.xlu0 0
    %195 = vperm.xlu0 %194, %v190
    %v196 = vpop.permute.xlu0 %195
    %v198 = vmul.f32 %v143, %v196
    %v199 = vmul.f32 %v145, %v196
    %v200 = vmul.f32 %v184, %v196
    %v201 = vmul.f32 %v186, %v196
    %203 = vset.pattern.permute.xlu0 0
    %204 = vperm.xlu0 %203, %v192
    %v205 = vpop.permute.xlu0 %204
    %v207 = vadd.f32 %v198, %v205
    %v208 = vadd.f32 %v199, %v205
    %v209 = vadd.f32 %v200, %v205
    %v210 = vadd.f32 %v201, %v205
    %s211 = scalar_lea.vmem %s2, 16
    %v212 = vld [vmem:[%s211] sm:$0xff]
    %vm213 = vcmp.gt.f32.partialorder %v207, 0.0
    %vm214 = vcmp.gt.f32.partialorder %v208, 0.0
    %vm215 = vcmp.gt.f32.partialorder %v209, 0.0
    %vm216 = vcmp.gt.f32.partialorder %v210, 0.0
    %218 = vset.pattern.permute.xlu0 0
    %219 = vperm.xlu0 %218, %v212
    %v220 = vpop.permute.xlu0 %219
    %v222 = vmul.f32 %v207, %v220
    %v223 = vmul.f32 %v208, %v220
    %v224 = vmul.f32 %v209, %v220
    %v225 = vmul.f32 %v210, %v220
    %v226 = vsel %vm213, %v207, %v222
    %v227 = vsel %vm214, %v208, %v223
    %v228 = vsel %vm215, %v209, %v224
    %v229 = vsel %vm216, %v210, %v225
    %230 = vst [vmem:[#allocation5] sm:$0xff] %v226
    %231 = vst [vmem:[#allocation5 + $0x8] sm:$0xff] %v227
    %s232 = scalar_lea.vmem [#allocation5], 16
    %233 = vst [vmem:[%s232] sm:$0xff] %v228
    %234 = vst [vmem:[%s232 + $0x8] sm:$0xff] %v229
    // Predicated region
    $region18: #{tpu_custom_call.1} parent=1 // pred_check
      _
    $region19: #{tpu_custom_call.1} parent=1 // pred_check_branch
      %236 = sbr.rel (0) target = $region21
    $region20: #{tpu_custom_call.1} parent=1 // pred_region
      %s238 = ssub.s32 512, 512
      %239 = vsyncadd [#allocation4], %s238
      %s240 = sshll.u32 [#allocation5], 4
      %s241 = int_to_ptr.vmem [resolvable:$true] %s240
      %246 = dma.vmem_to_hbm [thread:$0]  %s241, 512, %s3, [#allocation4], 256, 256, 16
    $region21: #{tpu_custom_call.1} parent=1 // pred_fallthru
      _
    // Predicated region
    $region22: #{tpu_custom_call.1} parent=1 // pred_check
      _
    $region23: #{tpu_custom_call.1} parent=1 // pred_check_branch
      %248 = sbr.rel (0) target = $region25
    $region24: #{tpu_custom_call.1} parent=1 // pred_region
      %249 = dma.done [#allocation4], 512
    $region25: #{tpu_custom_call.1} parent=1 // pred_fallthru
      _
    %250 = vsyncpa [#allocation3], 1
    %251 = vsyncpa [#allocation4], 1

</llo_original>
